<compile_context>
chip_gen: v5e
topology: v5e:2x2
jax: 0.10.0
libtpu: 0.0.40
codegen_flags: <defaults>
</compile_context>

<pallas_src>
import functools

import jax
import jax.numpy as jnp
from jax.experimental import pallas as pl
from jax.experimental.pallas import tpu as pltpu


def _round_up(x: int, m: int) -> int:
    return ((x + m - 1) // m) * m


def _nt_xent_kernel(q_ref, kt_ref, out_ref, m_sc, l_sc, pos_sc, *,
                    temperature: float, n_valid: int, batch: int):
    """One (query-tile, key-tile) step of the online NT-Xent reduction.

    q_ref : (TQ, Dp)  normalized query rows (bf16 or f32)
    kt_ref: (Dp, TK)  normalized keys, pre-transposed (bf16 or f32)
    out_ref: (TQ, 1)  per-row loss (written at the last key tile)
    m_sc / l_sc / pos_sc: (TQ, 1) f32 online-softmax state + positives accum.
    """
    qi = pl.program_id(0)
    ki = pl.program_id(1)
    tq = q_ref.shape[0]
    tk = kt_ref.shape[1]

    @pl.when(ki == 0)
    def _():
        m_sc[...] = jnp.full_like(m_sc, -1e30)
        l_sc[...] = jnp.zeros_like(l_sc)
        pos_sc[...] = jnp.zeros_like(pos_sc)

    # (TQ, TK) similarity slab on the MXU, f32 accumulation.
    inv_t = jnp.float32(1.0 / temperature)
    s = jax.lax.dot_general(
        q_ref[...], kt_ref[...],
        (((1,), (0,)), ((), ())),
        preferred_element_type=jnp.float32,
    ) * inv_t

    # Global row / col indices for this tile only (no (N, N) temporaries).
    row = qi * tq + jax.lax.broadcasted_iota(jnp.int32, (tq, tk), 0)
    col = ki * tk + jax.lax.broadcasted_iota(jnp.int32, (tq, tk), 1)
    pair = jnp.where(row < batch, row + batch, row - batch)

    # keep = valid (non-padded) key column and not the diagonal.
    keep = jnp.logical_and(col < n_valid, col != row)
    neg_big = jnp.float32(-1e30)
    s_keep = jnp.where(keep, s, neg_big)

    # Online logsumexp update (all state kept as 2-D (TQ, 1)).
    m_prev = m_sc[...]
    m_new = jnp.maximum(m_prev, jnp.max(s_keep, axis=1, keepdims=True))
    alpha = jnp.exp(m_prev - m_new)
    p = jnp.where(keep, jnp.exp(s - m_new), 0.0)     # kept entries have s <= m_new
    l_sc[...] = alpha * l_sc[...] + jnp.sum(p, axis=1, keepdims=True)
    m_sc[...] = m_new

    # Positive logit: exactly one matching column per row across all key tiles.
    pos_sc[...] += jnp.sum(jnp.where(col == pair, s, 0.0), axis=1, keepdims=True)

    @pl.when(ki == pl.num_programs(1) - 1)
    def _():
        lse = m_sc[...] + jnp.log(l_sc[...])         # (TQ, 1)
        per_row = lse - pos_sc[...]
        row_q = qi * tq + jax.lax.broadcasted_iota(jnp.int32, (tq, 1), 0)
        out_ref[...] = jnp.where(row_q < n_valid, per_row, 0.0)


@functools.partial(jax.jit, static_argnums=(2,), static_argnames=("matmul_dtype",))
def nt_xent_loss(z_i: jax.Array, z_j: jax.Array, temperature: float, *,
                 matmul_dtype=jnp.bfloat16) -> jax.Array:
    """NT-Xent loss.  z_i, z_j: (B, D).  Returns scalar float32 loss."""
    b, d = z_i.shape
    n = 2 * b

    # O(N*D) prep in the wrapper: concat, L2 normalize once, pad, transpose keys.
    z = jnp.concatenate([z_i, z_j], axis=0).astype(jnp.float32)       # (N, D)
    eps = jnp.float32(1e-8)                                           # torch CosineSimilarity eps
    sumsq = jnp.sum(z * z, axis=1, keepdims=True)
    zn = z * jax.lax.rsqrt(jnp.maximum(sumsq, eps * eps))             # (N, D) unit rows

    d_pad = _round_up(d, 128)                                         # lane-dense feature dim
    n_pad = _round_up(n, 128)
    tq = 256 if n_pad % 256 == 0 else 128                             # query tile (sublanes)
    tk = 512 if n_pad % 512 == 0 else (256 if n_pad % 256 == 0 else 128)  # key tile (lanes)

    zn_p = jnp.zeros((n_pad, d_pad), jnp.float32).at[:n, :d].set(zn)  # zero-padded rows/cols
    zn_q = zn_p.astype(matmul_dtype)                                  # (N_pad, D_pad) queries
    zn_kt = zn_p.T.astype(matmul_dtype)                               # (D_pad, N_pad) keys (pre-transposed)

    grid = (n_pad // tq, n_pad // tk)
    kernel = functools.partial(
        _nt_xent_kernel, temperature=float(temperature), n_valid=n, batch=b)

    per_row = pl.pallas_call(
        kernel,
        out_shape=jax.ShapeDtypeStruct((n_pad, 1), jnp.float32),
        grid_spec=pltpu.PrefetchScalarGridSpec(
            num_scalar_prefetch=0,
            grid=grid,
            in_specs=[
                pl.BlockSpec((tq, d_pad), lambda qi, ki: (qi, 0)),    # query rows
                pl.BlockSpec((d_pad, tk), lambda qi, ki: (0, ki)),    # key columns
            ],
            out_specs=pl.BlockSpec((tq, 1), lambda qi, ki: (qi, 0)),
            scratch_shapes=[
                pltpu.VMEM((tq, 1), jnp.float32),   # running max
                pltpu.VMEM((tq, 1), jnp.float32),   # running sum-of-exp
                pltpu.VMEM((tq, 1), jnp.float32),   # positives
            ],
        ),
        compiler_params=pltpu.CompilerParams(
            dimension_semantics=("parallel", "arbitrary"),
            vmem_limit_bytes=32 * 1024 * 1024,
        ),
    )(zn_q, zn_kt)

    return jnp.sum(per_row[:, 0])


def _nt_xent_reference(z_i, z_j, temperature):
    """Pure-JAX f32 reference mirroring the PyTorch forward exactly."""
    b = z_i.shape[0]
    n = 2 * b
    z = jnp.concatenate([z_i, z_j], axis=0).astype(jnp.float32)
    norm = jnp.maximum(jnp.linalg.norm(z, axis=1, keepdims=True), 1e-8)
    zn = z / norm
    sim = jnp.matmul(zn, zn.T, precision=jax.lax.Precision.HIGHEST) / temperature
    idx = jnp.arange(n)
    pair = jnp.where(idx < b, idx + b, idx - b)
    positives = sim[idx, pair]
    sim_m = jnp.where(jnp.eye(n, dtype=bool), -jnp.inf, sim)
    lse = jax.scipy.special.logsumexp(sim_m, axis=1)
    return jnp.sum(lse - positives)


if __name__ == "__main__":
    temperature = 0.5
    key = jax.random.PRNGKey(0)

    # Small toy shape (single tile) + a shape that exercises padding & multiple
    # query/key tiles with the online logsumexp.
    for (batch_size, hidden) in [(4, 32), (160, 96)]:
        k1, k2 = jax.random.split(jax.random.fold_in(key, batch_size))
        z_i = jax.random.normal(k1, (batch_size, hidden), dtype=jnp.float32)
        z_j = jax.random.normal(k2, (batch_size, hidden), dtype=jnp.float32)

        ref = _nt_xent_reference(z_i, z_j, temperature)

        # f32 MXU path (tight tolerance).
        loss_f32 = nt_xent_loss(z_i, z_j, temperature, matmul_dtype=jnp.float32)
        loss_f32 = jax.block_until_ready(loss_f32)
        assert jnp.allclose(loss_f32, ref, rtol=2e-3, atol=2e-3), (batch_size, loss_f32, ref)

        # bf16 MXU path (default / fast; looser tolerance per review note).
        loss_bf16 = nt_xent_loss(z_i, z_j, temperature)
        loss_bf16 = jax.block_until_ready(loss_bf16)
        assert jnp.allclose(loss_bf16, ref, rtol=3e-2, atol=3e-2), (batch_size, loss_bf16, ref)

    print("KERNEL_OK")
</pallas_src>

<mosaic_0001>
module attributes {stable_mosaic.version = 11 : i64} {
  func.func @_nt_xent_kernel(%arg0: i32, %arg1: i32, %arg2: memref<128x128xf32, #tpu.memory_space<vmem>>, %arg3: memref<128x128xf32, #tpu.memory_space<vmem>>, %arg4: memref<128x1xf32, #tpu.memory_space<vmem>>, %arg5: memref<128x1xf32, #tpu.memory_space<vmem>>, %arg6: memref<128x1xf32, #tpu.memory_space<vmem>>, %arg7: memref<128x1xf32, #tpu.memory_space<vmem>>) attributes {dimension_semantics = [#tpu.dimension_semantics<parallel>, #tpu.dimension_semantics<arbitrary>], iteration_bounds = array<i64: 1, 1>, scalar_prefetch = 0 : i64, scratch_operands = 3 : i64, tpu.core_type = #tpu.core_type<tc>, window_params = [{transform_indices = @transform_0, window_bounds = array<i64: 128, 128>}, {transform_indices = @transform_1, window_bounds = array<i64: 128, 128>}, {transform_indices = @transform_2, window_bounds = array<i64: 128, 1>}]} {
    %c0_i32 = arith.constant 0 : i32
    %0 = arith.cmpi eq, %arg1, %c0_i32 : i32
    %1 = arith.extui %0 : i1 to i32
    %c0_i32_0 = arith.constant 0 : i32
    %2 = arith.cmpi ne, %1, %c0_i32_0 : i32
    scf.if %2 {
      %cst_28 = arith.constant -1.000000e+30 : f32
      %58 = vector.broadcast %cst_28 : f32 to vector<128x1xf32>
      %c0_29 = arith.constant 0 : index
      %c0_30 = arith.constant 0 : index
      %59 = vector.load %arg5[%c0_29, %c0_30] : memref<128x1xf32, #tpu.memory_space<vmem>>, vector<128x1xf32>
      tpu.vector_store %arg5[%c0_29, %c0_30], %58 {strides = array<i32>} : memref<128x1xf32, #tpu.memory_space<vmem>>, vector<128x1xf32>,
      %cst_31 = arith.constant 0.000000e+00 : f32
      %60 = vector.broadcast %cst_31 : f32 to vector<128x1xf32>
      %c0_32 = arith.constant 0 : index
      %c0_33 = arith.constant 0 : index
      %61 = vector.load %arg6[%c0_32, %c0_33] : memref<128x1xf32, #tpu.memory_space<vmem>>, vector<128x1xf32>
      tpu.vector_store %arg6[%c0_32, %c0_33], %60 {strides = array<i32>} : memref<128x1xf32, #tpu.memory_space<vmem>>, vector<128x1xf32>,
      %cst_34 = arith.constant 0.000000e+00 : f32
      %62 = vector.broadcast %cst_34 : f32 to vector<128x1xf32>
      %c0_35 = arith.constant 0 : index
      %c0_36 = arith.constant 0 : index
      %63 = vector.load %arg7[%c0_35, %c0_36] : memref<128x1xf32, #tpu.memory_space<vmem>>, vector<128x1xf32>
      tpu.vector_store %arg7[%c0_35, %c0_36], %62 {strides = array<i32>} : memref<128x1xf32, #tpu.memory_space<vmem>>, vector<128x1xf32>,
    } else {
    }
    %c0 = arith.constant 0 : index
    %c0_1 = arith.constant 0 : index
    %3 = vector.load %arg2[%c0, %c0_1] : memref<128x128xf32, #tpu.memory_space<vmem>>, vector<128x128xf32>
    %c0_2 = arith.constant 0 : index
    %c0_3 = arith.constant 0 : index
    %4 = vector.load %arg3[%c0_2, %c0_3] : memref<128x128xf32, #tpu.memory_space<vmem>>, vector<128x128xf32>
    %cst = arith.constant dense<0.000000e+00> : vector<128x128xf32>
    %5 = tpu.matmul %3, %4, %cst {dimension_numbers = #tpu.dot_dimension_numbers<[1], [0], [0], [1], [0, 0, 1, 1], [], []>} : vector<128x128xf32>, vector<128x128xf32>, vector<128x128xf32> -> vector<128x128xf32>
    %cst_4 = arith.constant 2.000000e+00 : f32
    %6 = vector.broadcast %cst_4 : f32 to vector<128x128xf32>
    %7 = arith.mulf %5, %6 : vector<128x128xf32>
    %c128_i32 = arith.constant 128 : i32
    %8 = arith.muli %arg0, %c128_i32 : i32
    %9 = tpu.iota {dimensions = array<i32: 0>} : vector<128x128xi32>
    %10 = vector.broadcast %8 : i32 to vector<128x128xi32>
    %11 = arith.addi %10, %9 : vector<128x128xi32>
    %c128_i32_5 = arith.constant 128 : i32
    %12 = arith.muli %arg1, %c128_i32_5 : i32
    %13 = tpu.iota {dimensions = array<i32: 1>} : vector<128x128xi32>
    %14 = vector.broadcast %12 : i32 to vector<128x128xi32>
    %15 = arith.addi %14, %13 : vector<128x128xi32>
    %c4_i32 = arith.constant 4 : i32
    %16 = vector.broadcast %c4_i32 : i32 to vector<128x128xi32>
    %17 = arith.cmpi slt, %11, %16 : vector<128x128xi32>
    %c4_i32_6 = arith.constant 4 : i32
    %18 = vector.broadcast %c4_i32_6 : i32 to vector<128x128xi32>
    %19 = arith.addi %11, %18 : vector<128x128xi32>
    %c4_i32_7 = arith.constant 4 : i32
    %20 = vector.broadcast %c4_i32_7 : i32 to vector<128x128xi32>
    %21 = arith.subi %11, %20 : vector<128x128xi32>
    %22 = arith.select %17, %19, %21 : vector<128x128xi1>, vector<128x128xi32>
    %c8_i32 = arith.constant 8 : i32
    %23 = vector.broadcast %c8_i32 : i32 to vector<128x128xi32>
    %24 = arith.cmpi slt, %15, %23 : vector<128x128xi32>
    %25 = arith.cmpi ne, %15, %11 : vector<128x128xi32>
    %26 = arith.andi %24, %25 : vector<128x128xi1>
    %cst_8 = arith.constant -1.000000e+30 : f32
    %27 = vector.broadcast %cst_8 : f32 to vector<128x128xf32>
    %28 = arith.select %26, %7, %27 : vector<128x128xi1>, vector<128x128xf32>
    %c0_9 = arith.constant 0 : index
    %c0_10 = arith.constant 0 : index
    %29 = vector.load %arg5[%c0_9, %c0_10] : memref<128x1xf32, #tpu.memory_space<vmem>>, vector<128x1xf32>
    %cst_11 = arith.constant dense<0xFF800000> : vector<128xf32>
    %30 = vector.multi_reduction <maximumf>, %28, %cst_11 [1] : vector<128x128xf32> to vector<128xf32>
    %31 = vector.shape_cast %30 : vector<128xf32> to vector<128x1xf32>
    %32 = arith.maximumf %29, %31 : vector<128x1xf32>
    %33 = arith.subf %29, %32 : vector<128x1xf32>
    %34 = math.exp %33 : vector<128x1xf32>
    %35 = vector.broadcast %32 : vector<128x1xf32> to vector<128x128xf32>
    %36 = arith.subf %7, %35 : vector<128x128xf32>
    %37 = math.exp %36 : vector<128x128xf32>
    %cst_12 = arith.constant 0.000000e+00 : f32
    %38 = vector.broadcast %cst_12 : f32 to vector<128x128xf32>
    %39 = arith.select %26, %37, %38 : vector<128x128xi1>, vector<128x128xf32>
    %c0_13 = arith.constant 0 : index
    %c0_14 = arith.constant 0 : index
    %40 = vector.load %arg6[%c0_13, %c0_14] : memref<128x1xf32, #tpu.memory_space<vmem>>, vector<128x1xf32>
    %41 = arith.mulf %34, %40 : vector<128x1xf32>
    %cst_15 = arith.constant dense<0.000000e+00> : vector<128xf32>
    %42 = vector.multi_reduction <add>, %39, %cst_15 [1] : vector<128x128xf32> to vector<128xf32>
    %43 = vector.shape_cast %42 : vector<128xf32> to vector<128x1xf32>
    %44 = arith.addf %41, %43 : vector<128x1xf32>
    %c0_16 = arith.constant 0 : index
    %c0_17 = arith.constant 0 : index
    %45 = vector.load %arg6[%c0_16, %c0_17] : memref<128x1xf32, #tpu.memory_space<vmem>>, vector<128x1xf32>
    tpu.vector_store %arg6[%c0_16, %c0_17], %44 {strides = array<i32>} : memref<128x1xf32, #tpu.memory_space<vmem>>, vector<128x1xf32>,
    %c0_18 = arith.constant 0 : index
    %c0_19 = arith.constant 0 : index
    %46 = vector.load %arg5[%c0_18, %c0_19] : memref<128x1xf32, #tpu.memory_space<vmem>>, vector<128x1xf32>
    tpu.vector_store %arg5[%c0_18, %c0_19], %32 {strides = array<i32>} : memref<128x1xf32, #tpu.memory_space<vmem>>, vector<128x1xf32>,
    %c0_20 = arith.constant 0 : index
    %c0_21 = arith.constant 0 : index
    %47 = vector.load %arg7[%c0_20, %c0_21] : memref<128x1xf32, #tpu.memory_space<vmem>>, vector<128x1xf32>
    %48 = arith.cmpi eq, %15, %22 : vector<128x128xi32>
    %cst_22 = arith.constant 0.000000e+00 : f32
    %49 = vector.broadcast %cst_22 : f32 to vector<128x128xf32>
    %50 = arith.select %48, %7, %49 : vector<128x128xi1>, vector<128x128xf32>
    %cst_23 = arith.constant dense<0.000000e+00> : vector<128xf32>
    %51 = vector.multi_reduction <add>, %50, %cst_23 [1] : vector<128x128xf32> to vector<128xf32>
    %52 = vector.shape_cast %51 : vector<128xf32> to vector<128x1xf32>
    %53 = arith.addf %47, %52 : vector<128x1xf32>
    %c0_24 = arith.constant 0 : index
    %c0_25 = arith.constant 0 : index
    %54 = vector.load %arg7[%c0_24, %c0_25] : memref<128x1xf32, #tpu.memory_space<vmem>>, vector<128x1xf32>
    tpu.vector_store %arg7[%c0_24, %c0_25], %53 {strides = array<i32>} : memref<128x1xf32, #tpu.memory_space<vmem>>, vector<128x1xf32>,
    %c0_i32_26 = arith.constant 0 : i32
    %55 = arith.cmpi eq, %arg1, %c0_i32_26 : i32
    %56 = arith.extui %55 : i1 to i32
    %c0_i32_27 = arith.constant 0 : i32
    %57 = arith.cmpi ne, %56, %c0_i32_27 : i32
    scf.if %57 {
      %c0_28 = arith.constant 0 : index
      %c0_29 = arith.constant 0 : index
      %58 = vector.load %arg5[%c0_28, %c0_29] : memref<128x1xf32, #tpu.memory_space<vmem>>, vector<128x1xf32>
      %c0_30 = arith.constant 0 : index
      %c0_31 = arith.constant 0 : index
      %59 = vector.load %arg6[%c0_30, %c0_31] : memref<128x1xf32, #tpu.memory_space<vmem>>, vector<128x1xf32>
      %60 = math.log %59 : vector<128x1xf32>
      %61 = arith.addf %58, %60 : vector<128x1xf32>
      %c0_32 = arith.constant 0 : index
      %c0_33 = arith.constant 0 : index
      %62 = vector.load %arg7[%c0_32, %c0_33] : memref<128x1xf32, #tpu.memory_space<vmem>>, vector<128x1xf32>
      %63 = arith.subf %61, %62 : vector<128x1xf32>
      %c128_i32_34 = arith.constant 128 : i32
      %64 = arith.muli %arg0, %c128_i32_34 : i32
      %65 = tpu.iota {dimensions = array<i32: 0>} : vector<128x1xi32>
      %66 = vector.broadcast %64 : i32 to vector<128x1xi32>
      %67 = arith.addi %66, %65 : vector<128x1xi32>
      %c8_i32_35 = arith.constant 8 : i32
      %68 = vector.broadcast %c8_i32_35 : i32 to vector<128x1xi32>
      %69 = arith.cmpi slt, %67, %68 : vector<128x1xi32>
      %cst_36 = arith.constant 0.000000e+00 : f32
      %70 = vector.broadcast %cst_36 : f32 to vector<128x1xf32>
      %71 = arith.select %69, %63, %70 : vector<128x1xi1>, vector<128x1xf32>
      %c0_37 = arith.constant 0 : index
      %c0_38 = arith.constant 0 : index
      %72 = vector.load %arg4[%c0_37, %c0_38] : memref<128x1xf32, #tpu.memory_space<vmem>>, vector<128x1xf32>
      tpu.vector_store %arg4[%c0_37, %c0_38], %71 {strides = array<i32>} : memref<128x1xf32, #tpu.memory_space<vmem>>, vector<128x1xf32>,
    } else {
    }
    return
  }
  func.func @transform_0(%arg0: i32, %arg1: i32) -> (i32, i32) {
    %c0_i32 = arith.constant 0 : i32
    %c0_i32_0 = arith.constant 0 : i32
    return %arg0, %c0_i32 : i32, i32
  }
  func.func @transform_1(%arg0: i32, %arg1: i32) -> (i32, i32) {
    %c0_i32 = arith.constant 0 : i32
    %c0_i32_0 = arith.constant 0 : i32
    return %c0_i32, %arg1 : i32, i32
  }
  func.func @transform_2(%arg0: i32, %arg1: i32) -> (i32, i32) {
    %c0_i32 = arith.constant 0 : i32
    %c0_i32_0 = arith.constant 0 : i32
    return %arg0, %c0_i32 : i32, i32
  }
}

</mosaic_0001>

<llo_original>
// kernel: nt_xent_loss.1
$region0: #{nt_xent_loss.1}
  #allocation0 [shape = 'u32[]', space=smem, size = 0x4, offset = 0x4, fixed_abs, tag = 'smem constant byte address 0x4 - core index']
  #allocation1 [shape = 'u32[72,128]{1,0:T(1,128)}', space=vmem, size = 0x9000, scoped, tag = 'internal scratch']
  #allocation2 [shape = 'f32[128,1]{1,0:T(8,128)}', space=vmem, size = 0x10000, scoped, tag = 'scratch operand']
  #allocation3 [shape = 'f32[128,1]{1,0:T(8,128)}', space=vmem, size = 0x10000, scoped, tag = 'scratch operand']
  #allocation4 [shape = 'f32[128,1]{1,0:T(8,128)}', space=vmem, size = 0x10000, scoped, tag = 'scratch operand']
  %s0 = inlined_call_operand.vmem [shape: f32[128,128], index: 0, kind: input, shape index: {}]
  %s1 = inlined_call_operand.vmem [shape: f32[128,128], index: 1, kind: input, shape index: {}]
  %s2 = inlined_call_operand.vmem [shape: f32[128,1], index: 2, kind: output, shape index: {}]
  %s3 = sld [smem:[#allocation0]]
  $region26: #{nt_xent_loss.1} parent=0
    _
  %s5 = ssub.s32 1, %s3
  %s6 = scalar_select 0, %s5, %s3
  // Predicated region
  $region2: #{nt_xent_loss.1} parent=0 // pred_check
    _
  $region3: #{nt_xent_loss.1} parent=0 // pred_check_branch
    %8 = sbr.rel (0) target = $region5
  $region4: #{nt_xent_loss.1} parent=0 // pred_region
    _
  $region5: #{nt_xent_loss.1} parent=0 // pred_fallthru
    _
  // Predicated region
  $region6: #{nt_xent_loss.1} parent=0 // pred_check
    _
  $region7: #{nt_xent_loss.1} parent=0 // pred_check_branch
    %10 = sbr.rel (0) target = $region9
  $region8: #{nt_xent_loss.1} parent=0 // pred_region
    _
  $region9: #{nt_xent_loss.1} parent=0 // pred_fallthru
    _
  %p11 = scmp.eq.s32.totalorder 0, 0
  // Predicated region
  $region10: #{nt_xent_loss.1} parent=0 // pred_check
    %p12 = pneg %p11
  $region11: #{nt_xent_loss.1} parent=0 // pred_check_branch
    %14 = sbr.rel (%p12) target = $region13
  $region12: #{nt_xent_loss.1} parent=0 // pred_region
    %vm15 = vcmask 7168
    %16 = vst.msk [vmem:[#allocation2] sm:$0xff] %vm15, -1e+30
    %17 = vst.msk [vmem:[#allocation2 + $0x8] sm:$0xff] %vm15, -1e+30
    %18 = vst.msk [vmem:[#allocation2 + $0x10] sm:$0xff] %vm15, -1e+30
    %19 = vst.msk [vmem:[#allocation2 + $0x18] sm:$0xff] %vm15, -1e+30
    %20 = vst.msk [vmem:[#allocation2 + $0x20] sm:$0xff] %vm15, -1e+30
    %21 = vst.msk [vmem:[#allocation2 + $0x28] sm:$0xff] %vm15, -1e+30
    %22 = vst.msk [vmem:[#allocation2 + $0x30] sm:$0xff] %vm15, -1e+30
    %23 = vst.msk [vmem:[#allocation2 + $0x38] sm:$0xff] %vm15, -1e+30
    %24 = vst.msk [vmem:[#allocation2 + $0x40] sm:$0xff] %vm15, -1e+30
    %25 = vst.msk [vmem:[#allocation2 + $0x48] sm:$0xff] %vm15, -1e+30
    %26 = vst.msk [vmem:[#allocation2 + $0x50] sm:$0xff] %vm15, -1e+30
    %27 = vst.msk [vmem:[#allocation2 + $0x58] sm:$0xff] %vm15, -1e+30
    %28 = vst.msk [vmem:[#allocation2 + $0x60] sm:$0xff] %vm15, -1e+30
    %29 = vst.msk [vmem:[#allocation2 + $0x68] sm:$0xff] %vm15, -1e+30
    %30 = vst.msk [vmem:[#allocation2 + $0x70] sm:$0xff] %vm15, -1e+30
    %31 = vst.msk [vmem:[#allocation2 + $0x78] sm:$0xff] %vm15, -1e+30
    %32 = vst.msk [vmem:[#allocation3] sm:$0xff] %vm15, 0.0
    %33 = vst.msk [vmem:[#allocation3 + $0x8] sm:$0xff] %vm15, 0.0
    %34 = vst.msk [vmem:[#allocation3 + $0x10] sm:$0xff] %vm15, 0.0
    %35 = vst.msk [vmem:[#allocation3 + $0x18] sm:$0xff] %vm15, 0.0
    %36 = vst.msk [vmem:[#allocation3 + $0x20] sm:$0xff] %vm15, 0.0
    %37 = vst.msk [vmem:[#allocation3 + $0x28] sm:$0xff] %vm15, 0.0
    %38 = vst.msk [vmem:[#allocation3 + $0x30] sm:$0xff] %vm15, 0.0
    %39 = vst.msk [vmem:[#allocation3 + $0x38] sm:$0xff] %vm15, 0.0
    %40 = vst.msk [vmem:[#allocation3 + $0x40] sm:$0xff] %vm15, 0.0
    %41 = vst.msk [vmem:[#allocation3 + $0x48] sm:$0xff] %vm15, 0.0
    %42 = vst.msk [vmem:[#allocation3 + $0x50] sm:$0xff] %vm15, 0.0
    %43 = vst.msk [vmem:[#allocation3 + $0x58] sm:$0xff] %vm15, 0.0
    %44 = vst.msk [vmem:[#allocation3 + $0x60] sm:$0xff] %vm15, 0.0
    %45 = vst.msk [vmem:[#allocation3 + $0x68] sm:$0xff] %vm15, 0.0
    %46 = vst.msk [vmem:[#allocation3 + $0x70] sm:$0xff] %vm15, 0.0
    %47 = vst.msk [vmem:[#allocation3 + $0x78] sm:$0xff] %vm15, 0.0
    %48 = vst.msk [vmem:[#allocation4] sm:$0xff] %vm15, 0.0
    %49 = vst.msk [vmem:[#allocation4 + $0x8] sm:$0xff] %vm15, 0.0
    %50 = vst.msk [vmem:[#allocation4 + $0x10] sm:$0xff] %vm15, 0.0
    %51 = vst.msk [vmem:[#allocation4 + $0x18] sm:$0xff] %vm15, 0.0
    %52 = vst.msk [vmem:[#allocation4 + $0x20] sm:$0xff] %vm15, 0.0
    %53 = vst.msk [vmem:[#allocation4 + $0x28] sm:$0xff] %vm15, 0.0
    %54 = vst.msk [vmem:[#allocation4 + $0x30] sm:$0xff] %vm15, 0.0
    %55 = vst.msk [vmem:[#allocation4 + $0x38] sm:$0xff] %vm15, 0.0
    %56 = vst.msk [vmem:[#allocation4 + $0x40] sm:$0xff] %vm15, 0.0
    %57 = vst.msk [vmem:[#allocation4 + $0x48] sm:$0xff] %vm15, 0.0
    %58 = vst.msk [vmem:[#allocation4 + $0x50] sm:$0xff] %vm15, 0.0
    %59 = vst.msk [vmem:[#allocation4 + $0x58] sm:$0xff] %vm15, 0.0
    %60 = vst.msk [vmem:[#allocation4 + $0x60] sm:$0xff] %vm15, 0.0
    %61 = vst.msk [vmem:[#allocation4 + $0x68] sm:$0xff] %vm15, 0.0
    %62 = vst.msk [vmem:[#allocation4 + $0x70] sm:$0xff] %vm15, 0.0
    %63 = vst.msk [vmem:[#allocation4 + $0x78] sm:$0xff] %vm15, 0.0
  $region13: #{nt_xent_loss.1} parent=0 // pred_fallthru
    _
  %v64 = vld [vmem:[%s0] sm:$0xff]
  %v65 = vld [vmem:[%s0 + $0x8] sm:$0xff]
  %v66 = vld [vmem:[%s0 + $0x10] sm:$0xff]
  %v67 = vld [vmem:[%s0 + $0x18] sm:$0xff]
  %v68 = vld [vmem:[%s0 + $0x20] sm:$0xff]
  %v69 = vld [vmem:[%s0 + $0x28] sm:$0xff]
  %v70 = vld [vmem:[%s0 + $0x30] sm:$0xff]
  %v71 = vld [vmem:[%s0 + $0x38] sm:$0xff]
  %v72 = vld [vmem:[%s0 + $0x40] sm:$0xff]
  %v73 = vld [vmem:[%s0 + $0x48] sm:$0xff]
  %v74 = vld [vmem:[%s0 + $0x50] sm:$0xff]
  %v75 = vld [vmem:[%s0 + $0x58] sm:$0xff]
  %v76 = vld [vmem:[%s0 + $0x60] sm:$0xff]
  %v77 = vld [vmem:[%s0 + $0x68] sm:$0xff]
  %v78 = vld [vmem:[%s0 + $0x70] sm:$0xff]
  %v79 = vld [vmem:[%s0 + $0x78] sm:$0xff]
  %v80 = vld [vmem:[%s1] sm:$0xff]
  %v81 = vld [vmem:[%s1 + $0x8] sm:$0xff]
  %v82 = vld [vmem:[%s1 + $0x10] sm:$0xff]
  %v83 = vld [vmem:[%s1 + $0x18] sm:$0xff]
  %v84 = vld [vmem:[%s1 + $0x20] sm:$0xff]
  %v85 = vld [vmem:[%s1 + $0x28] sm:$0xff]
  %v86 = vld [vmem:[%s1 + $0x30] sm:$0xff]
  %v87 = vld [vmem:[%s1 + $0x38] sm:$0xff]
  %v88 = vld [vmem:[%s1 + $0x40] sm:$0xff]
  %v89 = vld [vmem:[%s1 + $0x48] sm:$0xff]
  %v90 = vld [vmem:[%s1 + $0x50] sm:$0xff]
  %v91 = vld [vmem:[%s1 + $0x58] sm:$0xff]
  %v92 = vld [vmem:[%s1 + $0x60] sm:$0xff]
  %v93 = vld [vmem:[%s1 + $0x68] sm:$0xff]
  %v94 = vld [vmem:[%s1 + $0x70] sm:$0xff]
  %v95 = vld [vmem:[%s1 + $0x78] sm:$0xff]
  %96 = vmatpush.msra.mxu0 %v95
  %97 = vmatpush.msra.mxu0 %v94
  %98 = vmatpush.msra.mxu0 %v93
  %99 = vmatpush.msra.mxu0 %v92
  %100 = vmatpush.msra.mxu0 %v91
  %101 = vmatpush.msra.mxu0 %v90
  %102 = vmatpush.msra.mxu0 %v89
  %103 = vmatpush.msra.mxu0 %v88
  %104 = vmatpush.msra.mxu0 %v87
  %105 = vmatpush.msra.mxu0 %v86
  %106 = vmatpush.msra.mxu0 %v85
  %107 = vmatpush.msra.mxu0 %v84
  %108 = vmatpush.msra.mxu0 %v83
  %109 = vmatpush.msra.mxu0 %v82
  %110 = vmatpush.msra.mxu0 %v81
  %111 = vmatpush.msra.mxu0 %v80
  %112 = vmatmul.f32.gmra.mxu0 %v64
  %v113 = vpop.f32.mrf.mxu0
  %v114 = vadd.f32 0.0, %v113
  %115 = vmatmul.f32.gmra.mxu0 %v65
  %v116 = vpop.f32.mrf.mxu0
  %v117 = vadd.f32 0.0, %v116
  %118 = vmatmul.f32.gmra.mxu0 %v66
  %v119 = vpop.f32.mrf.mxu0
  %v120 = vadd.f32 0.0, %v119
  %121 = vmatmul.f32.gmra.mxu0 %v67
  %v122 = vpop.f32.mrf.mxu0
  %v123 = vadd.f32 0.0, %v122
  %124 = vmatmul.f32.gmra.mxu0 %v68
  %v125 = vpop.f32.mrf.mxu0
  %v126 = vadd.f32 0.0, %v125
  %127 = vmatmul.f32.gmra.mxu0 %v69
  %v128 = vpop.f32.mrf.mxu0
  %v129 = vadd.f32 0.0, %v128
  %130 = vmatmul.f32.gmra.mxu0 %v70
  %v131 = vpop.f32.mrf.mxu0
  %v132 = vadd.f32 0.0, %v131
  %133 = vmatmul.f32.gmra.mxu0 %v71
  %v134 = vpop.f32.mrf.mxu0
  %v135 = vadd.f32 0.0, %v134
  %136 = vmatmul.f32.gmra.mxu0 %v72
  %v137 = vpop.f32.mrf.mxu0
  %v138 = vadd.f32 0.0, %v137
  %139 = vmatmul.f32.gmra.mxu0 %v73
  %v140 = vpop.f32.mrf.mxu0
  %v141 = vadd.f32 0.0, %v140
  %142 = vmatmul.f32.gmra.mxu0 %v74
  %v143 = vpop.f32.mrf.mxu0
  %v144 = vadd.f32 0.0, %v143
  %145 = vmatmul.f32.gmra.mxu0 %v75
  %v146 = vpop.f32.mrf.mxu0
  %v147 = vadd.f32 0.0, %v146
  %148 = vmatmul.f32.gmra.mxu0 %v76
  %v149 = vpop.f32.mrf.mxu0
  %v150 = vadd.f32 0.0, %v149
  %151 = vmatmul.f32.gmra.mxu0 %v77
  %v152 = vpop.f32.mrf.mxu0
  %v153 = vadd.f32 0.0, %v152
  %154 = vmatmul.f32.gmra.mxu0 %v78
  %v155 = vpop.f32.mrf.mxu0
  %v156 = vadd.f32 0.0, %v155
  %157 = vmatmul.f32.gmra.mxu0 %v79
  %v158 = vpop.f32.mrf.mxu0
  %v159 = vadd.f32 0.0, %v158
  %160 = vdwg.mxu0
  %v161 = vmul.f32 %v114, 2.0
  %v162 = vmul.f32 %v117, 2.0
  %v163 = vmul.f32 %v120, 2.0
  %v164 = vmul.f32 %v123, 2.0
  %v165 = vmul.f32 %v126, 2.0
  %v166 = vmul.f32 %v129, 2.0
  %v167 = vmul.f32 %v132, 2.0
  %v168 = vmul.f32 %v135, 2.0
  %v169 = vmul.f32 %v138, 2.0
  %v170 = vmul.f32 %v141, 2.0
  %v171 = vmul.f32 %v144, 2.0
  %v172 = vmul.f32 %v147, 2.0
  %v173 = vmul.f32 %v150, 2.0
  %v174 = vmul.f32 %v153, 2.0
  %v175 = vmul.f32 %v156, 2.0
  %v176 = vmul.f32 %v159, 2.0
  %s177 = smul.u32 0, 128
  %v178 = vlaneseq
  %v179 = vshrl.u32 %v178, 7
  %v180 = vadd.s32 %v179, 8
  %v181 = vadd.s32 %v179, 16
  %v182 = vadd.s32 %v179, 24
  %v183 = vadd.s32 %v179, 32
  %v184 = vadd.s32 %v179, 40
  %v185 = vadd.s32 %v179, 48
  %v186 = vadd.s32 %v179, 56
  %v187 = vadd.s32 %v179, 64
  %v188 = vadd.s32 %v179, 72
  %v189 = vadd.s32 %v179, 80
  %v190 = vadd.s32 %v179, 88
  %v191 = vadd.s32 %v179, 96
  %v192 = vadd.s32 %v179, 104
  %v193 = vadd.s32 %v179, 112
  %v194 = vadd.s32 %v179, 120
  %v195 = vstv %s177
  %v196 = vadd.s32 %v195, %v179
  %v197 = vadd.s32 %v195, %v180
  %v198 = vadd.s32 %v195, %v181
  %v199 = vadd.s32 %v195, %v182
  %v200 = vadd.s32 %v195, %v183
  %v201 = vadd.s32 %v195, %v184
  %v202 = vadd.s32 %v195, %v185
  %v203 = vadd.s32 %v195, %v186
  %v204 = vadd.s32 %v195, %v187
  %v205 = vadd.s32 %v195, %v188
  %v206 = vadd.s32 %v195, %v189
  %v207 = vadd.s32 %v195, %v190
  %v208 = vadd.s32 %v195, %v191
  %v209 = vadd.s32 %v195, %v192
  %v210 = vadd.s32 %v195, %v193
  %v211 = vadd.s32 %v195, %v194
  %s212 = smul.u32 0, 128
  %v213 = vlaneseq
  %v214 = vand.u32 %v213, 127
  %v215 = vstv %s212
  %v216 = vadd.s32 %v215, %v214
  %vm217 = vcmp.lt.s32.totalorder %v196, 4
  %vm218 = vcmp.lt.s32.totalorder %v197, 4
  %vm219 = vcmp.lt.s32.totalorder %v198, 4
  %vm220 = vcmp.lt.s32.totalorder %v199, 4
  %vm221 = vcmp.lt.s32.totalorder %v200, 4
  %vm222 = vcmp.lt.s32.totalorder %v201, 4
  %vm223 = vcmp.lt.s32.totalorder %v202, 4
  %vm224 = vcmp.lt.s32.totalorder %v203, 4
  %vm225 = vcmp.lt.s32.totalorder %v204, 4
  %vm226 = vcmp.lt.s32.totalorder %v205, 4
  %vm227 = vcmp.lt.s32.totalorder %v206, 4
  %vm228 = vcmp.lt.s32.totalorder %v207, 4
  %vm229 = vcmp.lt.s32.totalorder %v208, 4
  %vm230 = vcmp.lt.s32.totalorder %v209, 4
  %vm231 = vcmp.lt.s32.totalorder %v210, 4
  %vm232 = vcmp.lt.s32.totalorder %v211, 4
  %v233 = vadd.s32 %v196, 4
  %v234 = vadd.s32 %v197, 4
  %v235 = vadd.s32 %v198, 4
  %v236 = vadd.s32 %v199, 4
  %v237 = vadd.s32 %v200, 4
  %v238 = vadd.s32 %v201, 4
  %v239 = vadd.s32 %v202, 4
  %v240 = vadd.s32 %v203, 4
  %v241 = vadd.s32 %v204, 4
  %v242 = vadd.s32 %v205, 4
  %v243 = vadd.s32 %v206, 4
  %v244 = vadd.s32 %v207, 4
  %v245 = vadd.s32 %v208, 4
  %v246 = vadd.s32 %v209, 4
  %v247 = vadd.s32 %v210, 4
  %v248 = vadd.s32 %v211, 4
  %v249 = vsub.s32 %v196, 4
  %v250 = vsub.s32 %v197, 4
  %v251 = vsub.s32 %v198, 4
  %v252 = vsub.s32 %v199, 4
  %v253 = vsub.s32 %v200, 4
  %v254 = vsub.s32 %v201, 4
  %v255 = vsub.s32 %v202, 4
  %v256 = vsub.s32 %v203, 4
  %v257 = vsub.s32 %v204, 4
  %v258 = vsub.s32 %v205, 4
  %v259 = vsub.s32 %v206, 4
  %v260 = vsub.s32 %v207, 4
  %v261 = vsub.s32 %v208, 4
  %v262 = vsub.s32 %v209, 4
  %v263 = vsub.s32 %v210, 4
  %v264 = vsub.s32 %v211, 4
  %v265 = vsel %vm217, %v233, %v249
  %v266 = vsel %vm218, %v234, %v250
  %v267 = vsel %vm219, %v235, %v251
  %v268 = vsel %vm220, %v236, %v252
  %v269 = vsel %vm221, %v237, %v253
  %v270 = vsel %vm222, %v238, %v254
  %v271 = vsel %vm223, %v239, %v255
  %v272 = vsel %vm224, %v240, %v256
  %v273 = vsel %vm225, %v241, %v257
  %v274 = vsel %vm226, %v242, %v258
  %v275 = vsel %vm227, %v243, %v259
  %v276 = vsel %vm228, %v244, %v260
  %v277 = vsel %vm229, %v245, %v261
  %v278 = vsel %vm230, %v246, %v262
  %v279 = vsel %vm231, %v247, %v263
  %v280 = vsel %vm232, %v248, %v264
  %vm281 = vcmp.lt.s32.totalorder %v216, 8
  %vm282 = vcmp.ne.s32.totalorder %v216, %v196
  %vm283 = vcmp.ne.s32.totalorder %v216, %v197
  %vm284 = vcmp.ne.s32.totalorder %v216, %v198
  %vm285 = vcmp.ne.s32.totalorder %v216, %v199
  %vm286 = vcmp.ne.s32.totalorder %v216, %v200
  %vm287 = vcmp.ne.s32.totalorder %v216, %v201
  %vm288 = vcmp.ne.s32.totalorder %v216, %v202
  %vm289 = vcmp.ne.s32.totalorder %v216, %v203
  %vm290 = vcmp.ne.s32.totalorder %v216, %v204
  %vm291 = vcmp.ne.s32.totalorder %v216, %v205
  %vm292 = vcmp.ne.s32.totalorder %v216, %v206
  %vm293 = vcmp.ne.s32.totalorder %v216, %v207
  %vm294 = vcmp.ne.s32.totalorder %v216, %v208
  %vm295 = vcmp.ne.s32.totalorder %v216, %v209
  %vm296 = vcmp.ne.s32.totalorder %v216, %v210
  %vm297 = vcmp.ne.s32.totalorder %v216, %v211
  %vm298 = vmand %vm281, %vm282
  %vm299 = vmand %vm281, %vm283
  %vm300 = vmand %vm281, %vm284
  %vm301 = vmand %vm281, %vm285
  %vm302 = vmand %vm281, %vm286
  %vm303 = vmand %vm281, %vm287
  %vm304 = vmand %vm281, %vm288
  %vm305 = vmand %vm281, %vm289
  %vm306 = vmand %vm281, %vm290
  %vm307 = vmand %vm281, %vm291
  %vm308 = vmand %vm281, %vm292
  %vm309 = vmand %vm281, %vm293
  %vm310 = vmand %vm281, %vm294
  %vm311 = vmand %vm281, %vm295
  %vm312 = vmand %vm281, %vm296
  %vm313 = vmand %vm281, %vm297
  %v314 = vsel %vm298, %v161, -1e+30
  %v315 = vsel %vm299, %v162, -1e+30
  %v316 = vsel %vm300, %v163, -1e+30
  %v317 = vsel %vm301, %v164, -1e+30
  %v318 = vsel %vm302, %v165, -1e+30
  %v319 = vsel %vm303, %v166, -1e+30
  %v320 = vsel %vm304, %v167, -1e+30
  %v321 = vsel %vm305, %v168, -1e+30
  %v322 = vsel %vm306, %v169, -1e+30
  %v323 = vsel %vm307, %v170, -1e+30
  %v324 = vsel %vm308, %v171, -1e+30
  %v325 = vsel %vm309, %v172, -1e+30
  %v326 = vsel %vm310, %v173, -1e+30
  %v327 = vsel %vm311, %v174, -1e+30
  %v328 = vsel %vm312, %v175, -1e+30
  %v329 = vsel %vm313, %v176, -1e+30
  %v330 = vld [vmem:[#allocation2] sm:$0xff]
  %v331 = vld [vmem:[#allocation2 + $0x8] sm:$0xff]
  %v332 = vld [vmem:[#allocation2 + $0x10] sm:$0xff]
  %v333 = vld [vmem:[#allocation2 + $0x18] sm:$0xff]
  %v334 = vld [vmem:[#allocation2 + $0x20] sm:$0xff]
  %v335 = vld [vmem:[#allocation2 + $0x28] sm:$0xff]
  %v336 = vld [vmem:[#allocation2 + $0x30] sm:$0xff]
  %v337 = vld [vmem:[#allocation2 + $0x38] sm:$0xff]
  %v338 = vld [vmem:[#allocation2 + $0x40] sm:$0xff]
  %v339 = vld [vmem:[#allocation2 + $0x48] sm:$0xff]
  %v340 = vld [vmem:[#allocation2 + $0x50] sm:$0xff]
  %v341 = vld [vmem:[#allocation2 + $0x58] sm:$0xff]
  %v342 = vld [vmem:[#allocation2 + $0x60] sm:$0xff]
  %v343 = vld [vmem:[#allocation2 + $0x68] sm:$0xff]
  %v344 = vld [vmem:[#allocation2 + $0x70] sm:$0xff]
  %v345 = vld [vmem:[#allocation2 + $0x78] sm:$0xff]
  %346 = vmax.xlane.f32.xlu0 %v314
  %v347 = vpop.xlane.xlu0 %346
  %348 = vmax.xlane.f32.xlu0 %v315
  %v349 = vpop.xlane.xlu0 %348
  %350 = vmax.xlane.f32.xlu0 %v316
  %v351 = vpop.xlane.xlu0 %350
  %352 = vmax.xlane.f32.xlu0 %v317
  %v353 = vpop.xlane.xlu0 %352
  %354 = vmax.xlane.f32.xlu0 %v318
  %v355 = vpop.xlane.xlu0 %354
  %356 = vmax.xlane.f32.xlu0 %v319
  %v357 = vpop.xlane.xlu0 %356
  %358 = vmax.xlane.f32.xlu0 %v320
  %v359 = vpop.xlane.xlu0 %358
  %360 = vmax.xlane.f32.xlu0 %v321
  %v361 = vpop.xlane.xlu0 %360
  %362 = vmax.xlane.f32.xlu0 %v322
  %v363 = vpop.xlane.xlu0 %362
  %364 = vmax.xlane.f32.xlu0 %v323
  %v365 = vpop.xlane.xlu0 %364
  %366 = vmax.xlane.f32.xlu0 %v324
  %v367 = vpop.xlane.xlu0 %366
  %368 = vmax.xlane.f32.xlu0 %v325
  %v369 = vpop.xlane.xlu0 %368
  %370 = vmax.xlane.f32.xlu0 %v326
  %v371 = vpop.xlane.xlu0 %370
  %372 = vmax.xlane.f32.xlu0 %v327
  %v373 = vpop.xlane.xlu0 %372
  %374 = vmax.xlane.f32.xlu0 %v328
  %v375 = vpop.xlane.xlu0 %374
  %376 = vmax.xlane.f32.xlu0 %v329
  %v377 = vpop.xlane.xlu0 %376
  %v378 = vmax.f32 %v330, %v347
  %v379 = vmax.f32 %v331, %v349
  %v380 = vmax.f32 %v332, %v351
  %v381 = vmax.f32 %v333, %v353
  %v382 = vmax.f32 %v334, %v355
  %v383 = vmax.f32 %v335, %v357
  %v384 = vmax.f32 %v336, %v359
  %v385 = vmax.f32 %v337, %v361
  %v386 = vmax.f32 %v338, %v363
  %v387 = vmax.f32 %v339, %v365
  %v388 = vmax.f32 %v340, %v367
  %v389 = vmax.f32 %v341, %v369
  %v390 = vmax.f32 %v342, %v371
  %v391 = vmax.f32 %v343, %v373
  %v392 = vmax.f32 %v344, %v375
  %v393 = vmax.f32 %v345, %v377
  %v394 = vsub.f32 %v330, %v378
  %v395 = vsub.f32 %v331, %v379
  %v396 = vsub.f32 %v332, %v380
  %v397 = vsub.f32 %v333, %v381
  %v398 = vsub.f32 %v334, %v382
  %v399 = vsub.f32 %v335, %v383
  %v400 = vsub.f32 %v336, %v384
  %v401 = vsub.f32 %v337, %v385
  %v402 = vsub.f32 %v338, %v386
  %v403 = vsub.f32 %v339, %v387
  %v404 = vsub.f32 %v340, %v388
  %v405 = vsub.f32 %v341, %v389
  %v406 = vsub.f32 %v342, %v390
  %v407 = vsub.f32 %v343, %v391
  %v408 = vsub.f32 %v344, %v392
  %v409 = vsub.f32 %v345, %v393
  %v410 = vmul.f32 %v394, 1.442695
  %v411 = vpow.pop %v410
  %v412 = vmul.f32 %v395, 1.442695
  %v413 = vpow.pop %v412
  %v414 = vmul.f32 %v396, 1.442695
  %v415 = vpow.pop %v414
  %v416 = vmul.f32 %v397, 1.442695
  %v417 = vpow.pop %v416
  %v418 = vmul.f32 %v398, 1.442695
  %v419 = vpow.pop %v418
  %v420 = vmul.f32 %v399, 1.442695
  %v421 = vpow.pop %v420
  %v422 = vmul.f32 %v400, 1.442695
  %v423 = vpow.pop %v422
  %v424 = vmul.f32 %v401, 1.442695
  %v425 = vpow.pop %v424
  %v426 = vmul.f32 %v402, 1.442695
  %v427 = vpow.pop %v426
  %v428 = vmul.f32 %v403, 1.442695
  %v429 = vpow.pop %v428
  %v430 = vmul.f32 %v404, 1.442695
  %v431 = vpow.pop %v430
  %v432 = vmul.f32 %v405, 1.442695
  %v433 = vpow.pop %v432
  %v434 = vmul.f32 %v406, 1.442695
  %v435 = vpow.pop %v434
  %v436 = vmul.f32 %v407, 1.442695
  %v437 = vpow.pop %v436
  %v438 = vmul.f32 %v408, 1.442695
  %v439 = vpow.pop %v438
  %v440 = vmul.f32 %v409, 1.442695
  %v441 = vpow.pop %v440
  %443 = vset.pattern.permute.xlu0 0
  %444 = vperm.xlu0 %443, %v378
  %v445 = vpop.permute.xlu0 %444
  %448 = vset.pattern.permute.xlu0 0
  %449 = vperm.xlu0 %448, %v379
  %v450 = vpop.permute.xlu0 %449
  %453 = vset.pattern.permute.xlu0 0
  %454 = vperm.xlu0 %453, %v380
  %v455 = vpop.permute.xlu0 %454
  %458 = vset.pattern.permute.xlu0 0
  %459 = vperm.xlu0 %458, %v381
  %v460 = vpop.permute.xlu0 %459
  %463 = vset.pattern.permute.xlu0 0
  %464 = vperm.xlu0 %463, %v382
  %v465 = vpop.permute.xlu0 %464
  %468 = vset.pattern.permute.xlu0 0
  %469 = vperm.xlu0 %468, %v383
  %v470 = vpop.permute.xlu0 %469
  %473 = vset.pattern.permute.xlu0 0
  %474 = vperm.xlu0 %473, %v384
  %v475 = vpop.permute.xlu0 %474
  %478 = vset.pattern.permute.xlu0 0
  %479 = vperm.xlu0 %478, %v385
  %v480 = vpop.permute.xlu0 %479
  %483 = vset.pattern.permute.xlu0 0
  %484 = vperm.xlu0 %483, %v386
  %v485 = vpop.permute.xlu0 %484
  %488 = vset.pattern.permute.xlu0 0
  %489 = vperm.xlu0 %488, %v387
  %v490 = vpop.permute.xlu0 %489
  %493 = vset.pattern.permute.xlu0 0
  %494 = vperm.xlu0 %493, %v388
  %v495 = vpop.permute.xlu0 %494
  %498 = vset.pattern.permute.xlu0 0
  %499 = vperm.xlu0 %498, %v389
  %v500 = vpop.permute.xlu0 %499
  %503 = vset.pattern.permute.xlu0 0
  %504 = vperm.xlu0 %503, %v390
  %v505 = vpop.permute.xlu0 %504
  %508 = vset.pattern.permute.xlu0 0
  %509 = vperm.xlu0 %508, %v391
  %v510 = vpop.permute.xlu0 %509
  %513 = vset.pattern.permute.xlu0 0
  %514 = vperm.xlu0 %513, %v392
  %v515 = vpop.permute.xlu0 %514
  %518 = vset.pattern.permute.xlu0 0
  %519 = vperm.xlu0 %518, %v393
  %v520 = vpop.permute.xlu0 %519
  %v522 = vsub.f32 %v161, %v445
  %v523 = vsub.f32 %v162, %v450
  %v524 = vsub.f32 %v163, %v455
  %v525 = vsub.f32 %v164, %v460
  %v526 = vsub.f32 %v165, %v465
  %v527 = vsub.f32 %v166, %v470
  %v528 = vsub.f32 %v167, %v475
  %v529 = vsub.f32 %v168, %v480
  %v530 = vsub.f32 %v169, %v485
  %v531 = vsub.f32 %v170, %v490
  %v532 = vsub.f32 %v171, %v495
  %v533 = vsub.f32 %v172, %v500
  %v534 = vsub.f32 %v173, %v505
  %v535 = vsub.f32 %v174, %v510
  %v536 = vsub.f32 %v175, %v515
  %v537 = vsub.f32 %v176, %v520
  %v538 = vmul.f32 %v522, 1.442695
  %v539 = vpow.pop %v538
  %v540 = vmul.f32 %v523, 1.442695
  %v541 = vpow.pop %v540
  %v542 = vmul.f32 %v524, 1.442695
  %v543 = vpow.pop %v542
  %v544 = vmul.f32 %v525, 1.442695
  %v545 = vpow.pop %v544
  %v546 = vmul.f32 %v526, 1.442695
  %v547 = vpow.pop %v546
  %v548 = vmul.f32 %v527, 1.442695
  %v549 = vpow.pop %v548
  %v550 = vmul.f32 %v528, 1.442695
  %v551 = vpow.pop %v550
  %v552 = vmul.f32 %v529, 1.442695
  %v553 = vpow.pop %v552
  %v554 = vmul.f32 %v530, 1.442695
  %v555 = vpow.pop %v554
  %v556 = vmul.f32 %v531, 1.442695
  %v557 = vpow.pop %v556
  %v558 = vmul.f32 %v532, 1.442695
  %v559 = vpow.pop %v558
  %v560 = vmul.f32 %v533, 1.442695
  %v561 = vpow.pop %v560
  %v562 = vmul.f32 %v534, 1.442695
  %v563 = vpow.pop %v562
  %v564 = vmul.f32 %v535, 1.442695
  %v565 = vpow.pop %v564
  %v566 = vmul.f32 %v536, 1.442695
  %v567 = vpow.pop %v566
  %v568 = vmul.f32 %v537, 1.442695
  %v569 = vpow.pop %v568
  %v570 = vsel %vm298, %v539, 0.0
  %v571 = vsel %vm299, %v541, 0.0
  %v572 = vsel %vm300, %v543, 0.0
  %v573 = vsel %vm301, %v545, 0.0
  %v574 = vsel %vm302, %v547, 0.0
  %v575 = vsel %vm303, %v549, 0.0
  %v576 = vsel %vm304, %v551, 0.0
  %v577 = vsel %vm305, %v553, 0.0
  %v578 = vsel %vm306, %v555, 0.0
  %v579 = vsel %vm307, %v557, 0.0
  %v580 = vsel %vm308, %v559, 0.0
  %v581 = vsel %vm309, %v561, 0.0
  %v582 = vsel %vm310, %v563, 0.0
  %v583 = vsel %vm311, %v565, 0.0
  %v584 = vsel %vm312, %v567, 0.0
  %v585 = vsel %vm313, %v569, 0.0
  %v586 = vld [vmem:[#allocation3] sm:$0xff]
  %v587 = vld [vmem:[#allocation3 + $0x8] sm:$0xff]
  %v588 = vld [vmem:[#allocation3 + $0x10] sm:$0xff]
  %v589 = vld [vmem:[#allocation3 + $0x18] sm:$0xff]
  %v590 = vld [vmem:[#allocation3 + $0x20] sm:$0xff]
  %v591 = vld [vmem:[#allocation3 + $0x28] sm:$0xff]
  %v592 = vld [vmem:[#allocation3 + $0x30] sm:$0xff]
  %v593 = vld [vmem:[#allocation3 + $0x38] sm:$0xff]
  %v594 = vld [vmem:[#allocation3 + $0x40] sm:$0xff]
  %v595 = vld [vmem:[#allocation3 + $0x48] sm:$0xff]
  %v596 = vld [vmem:[#allocation3 + $0x50] sm:$0xff]
  %v597 = vld [vmem:[#allocation3 + $0x58] sm:$0xff]
  %v598 = vld [vmem:[#allocation3 + $0x60] sm:$0xff]
  %v599 = vld [vmem:[#allocation3 + $0x68] sm:$0xff]
  %v600 = vld [vmem:[#allocation3 + $0x70] sm:$0xff]
  %v601 = vld [vmem:[#allocation3 + $0x78] sm:$0xff]
  %v602 = vmul.f32 %v411, %v586
  %v603 = vmul.f32 %v413, %v587
  %v604 = vmul.f32 %v415, %v588
  %v605 = vmul.f32 %v417, %v589
  %v606 = vmul.f32 %v419, %v590
  %v607 = vmul.f32 %v421, %v591
  %v608 = vmul.f32 %v423, %v592
  %v609 = vmul.f32 %v425, %v593
  %v610 = vmul.f32 %v427, %v594
  %v611 = vmul.f32 %v429, %v595
  %v612 = vmul.f32 %v431, %v596
  %v613 = vmul.f32 %v433, %v597
  %v614 = vmul.f32 %v435, %v598
  %v615 = vmul.f32 %v437, %v599
  %v616 = vmul.f32 %v439, %v600
  %v617 = vmul.f32 %v441, %v601
  %618 = vadd.xlane.f32.xlu0 %v570
  %v619 = vpop.xlane.xlu0 %618
  %620 = vadd.xlane.f32.xlu0 %v571
  %v621 = vpop.xlane.xlu0 %620
  %622 = vadd.xlane.f32.xlu0 %v572
  %v623 = vpop.xlane.xlu0 %622
  %624 = vadd.xlane.f32.xlu0 %v573
  %v625 = vpop.xlane.xlu0 %624
  %626 = vadd.xlane.f32.xlu0 %v574
  %v627 = vpop.xlane.xlu0 %626
  %628 = vadd.xlane.f32.xlu0 %v575
  %v629 = vpop.xlane.xlu0 %628
  %630 = vadd.xlane.f32.xlu0 %v576
  %v631 = vpop.xlane.xlu0 %630
  %632 = vadd.xlane.f32.xlu0 %v577
  %v633 = vpop.xlane.xlu0 %632
  %634 = vadd.xlane.f32.xlu0 %v578
  %v635 = vpop.xlane.xlu0 %634
  %636 = vadd.xlane.f32.xlu0 %v579
  %v637 = vpop.xlane.xlu0 %636
  %638 = vadd.xlane.f32.xlu0 %v580
  %v639 = vpop.xlane.xlu0 %638
  %640 = vadd.xlane.f32.xlu0 %v581
  %v641 = vpop.xlane.xlu0 %640
  %642 = vadd.xlane.f32.xlu0 %v582
  %v643 = vpop.xlane.xlu0 %642
  %644 = vadd.xlane.f32.xlu0 %v583
  %v645 = vpop.xlane.xlu0 %644
  %646 = vadd.xlane.f32.xlu0 %v584
  %v647 = vpop.xlane.xlu0 %646
  %648 = vadd.xlane.f32.xlu0 %v585
  %v649 = vpop.xlane.xlu0 %648
  %v650 = vadd.f32 %v602, %v619
  %v651 = vadd.f32 %v603, %v621
  %v652 = vadd.f32 %v604, %v623
  %v653 = vadd.f32 %v605, %v625
  %v654 = vadd.f32 %v606, %v627
  %v655 = vadd.f32 %v607, %v629
  %v656 = vadd.f32 %v608, %v631
  %v657 = vadd.f32 %v609, %v633
  %v658 = vadd.f32 %v610, %v635
  %v659 = vadd.f32 %v611, %v637
  %v660 = vadd.f32 %v612, %v639
  %v661 = vadd.f32 %v613, %v641
  %v662 = vadd.f32 %v614, %v643
  %v663 = vadd.f32 %v615, %v645
  %v664 = vadd.f32 %v616, %v647
  %v665 = vadd.f32 %v617, %v649
  %vm666 = vcmask 7168
  %667 = vst.msk [vmem:[#allocation3] sm:$0xff] %vm666, %v650
  %668 = vst.msk [vmem:[#allocation3 + $0x8] sm:$0xff] %vm666, %v651
  %669 = vst.msk [vmem:[#allocation3 + $0x10] sm:$0xff] %vm666, %v652
  %670 = vst.msk [vmem:[#allocation3 + $0x18] sm:$0xff] %vm666, %v653
  %671 = vst.msk [vmem:[#allocation3 + $0x20] sm:$0xff] %vm666, %v654
  %672 = vst.msk [vmem:[#allocation3 + $0x28] sm:$0xff] %vm666, %v655
  %673 = vst.msk [vmem:[#allocation3 + $0x30] sm:$0xff] %vm666, %v656
  %674 = vst.msk [vmem:[#allocation3 + $0x38] sm:$0xff] %vm666, %v657
  %675 = vst.msk [vmem:[#allocation3 + $0x40] sm:$0xff] %vm666, %v658
  %676 = vst.msk [vmem:[#allocation3 + $0x48] sm:$0xff] %vm666, %v659
  %677 = vst.msk [vmem:[#allocation3 + $0x50] sm:$0xff] %vm666, %v660
  %678 = vst.msk [vmem:[#allocation3 + $0x58] sm:$0xff] %vm666, %v661
  %679 = vst.msk [vmem:[#allocation3 + $0x60] sm:$0xff] %vm666, %v662
  %680 = vst.msk [vmem:[#allocation3 + $0x68] sm:$0xff] %vm666, %v663
  %681 = vst.msk [vmem:[#allocation3 + $0x70] sm:$0xff] %vm666, %v664
  %682 = vst.msk [vmem:[#allocation3 + $0x78] sm:$0xff] %vm666, %v665
  %683 = vst.msk [vmem:[#allocation2] sm:$0xff] %vm666, %v378
  %684 = vst.msk [vmem:[#allocation2 + $0x8] sm:$0xff] %vm666, %v379
  %685 = vst.msk [vmem:[#allocation2 + $0x10] sm:$0xff] %vm666, %v380
  %686 = vst.msk [vmem:[#allocation2 + $0x18] sm:$0xff] %vm666, %v381
  %687 = vst.msk [vmem:[#allocation2 + $0x20] sm:$0xff] %vm666, %v382
  %688 = vst.msk [vmem:[#allocation2 + $0x28] sm:$0xff] %vm666, %v383
  %689 = vst.msk [vmem:[#allocation2 + $0x30] sm:$0xff] %vm666, %v384
  %690 = vst.msk [vmem:[#allocation2 + $0x38] sm:$0xff] %vm666, %v385
  %691 = vst.msk [vmem:[#allocation2 + $0x40] sm:$0xff] %vm666, %v386
  %692 = vst.msk [vmem:[#allocation2 + $0x48] sm:$0xff] %vm666, %v387
  %693 = vst.msk [vmem:[#allocation2 + $0x50] sm:$0xff] %vm666, %v388
  %694 = vst.msk [vmem:[#allocation2 + $0x58] sm:$0xff] %vm666, %v389
  %695 = vst.msk [vmem:[#allocation2 + $0x60] sm:$0xff] %vm666, %v390
  %696 = vst.msk [vmem:[#allocation2 + $0x68] sm:$0xff] %vm666, %v391
  %697 = vst.msk [vmem:[#allocation2 + $0x70] sm:$0xff] %vm666, %v392
  %698 = vst.msk [vmem:[#allocation2 + $0x78] sm:$0xff] %vm666, %v393
  %v699 = vld [vmem:[#allocation4] sm:$0xff]
  %v700 = vld [vmem:[#allocation4 + $0x8] sm:$0xff]
  %v701 = vld [vmem:[#allocation4 + $0x10] sm:$0xff]
  %v702 = vld [vmem:[#allocation4 + $0x18] sm:$0xff]
  %v703 = vld [vmem:[#allocation4 + $0x20] sm:$0xff]
  %v704 = vld [vmem:[#allocation4 + $0x28] sm:$0xff]
  %v705 = vld [vmem:[#allocation4 + $0x30] sm:$0xff]
  %v706 = vld [vmem:[#allocation4 + $0x38] sm:$0xff]
  %v707 = vld [vmem:[#allocation4 + $0x40] sm:$0xff]
  %v708 = vld [vmem:[#allocation4 + $0x48] sm:$0xff]
  %v709 = vld [vmem:[#allocation4 + $0x50] sm:$0xff]
  %v710 = vld [vmem:[#allocation4 + $0x58] sm:$0xff]
  %v711 = vld [vmem:[#allocation4 + $0x60] sm:$0xff]
  %v712 = vld [vmem:[#allocation4 + $0x68] sm:$0xff]
  %v713 = vld [vmem:[#allocation4 + $0x70] sm:$0xff]
  %v714 = vld [vmem:[#allocation4 + $0x78] sm:$0xff]
  %vm715 = vcmp.eq.s32.totalorder %v216, %v265
  %vm716 = vcmp.eq.s32.totalorder %v216, %v266
  %vm717 = vcmp.eq.s32.totalorder %v216, %v267
  %vm718 = vcmp.eq.s32.totalorder %v216, %v268
  %vm719 = vcmp.eq.s32.totalorder %v216, %v269
  %vm720 = vcmp.eq.s32.totalorder %v216, %v270
  %vm721 = vcmp.eq.s32.totalorder %v216, %v271
  %vm722 = vcmp.eq.s32.totalorder %v216, %v272
  %vm723 = vcmp.eq.s32.totalorder %v216, %v273
  %vm724 = vcmp.eq.s32.totalorder %v216, %v274
  %vm725 = vcmp.eq.s32.totalorder %v216, %v275
  %vm726 = vcmp.eq.s32.totalorder %v216, %v276
  %vm727 = vcmp.eq.s32.totalorder %v216, %v277
  %vm728 = vcmp.eq.s32.totalorder %v216, %v278
  %vm729 = vcmp.eq.s32.totalorder %v216, %v279
  %vm730 = vcmp.eq.s32.totalorder %v216, %v280
  %v731 = vsel %vm715, %v161, 0.0
  %v732 = vsel %vm716, %v162, 0.0
  %v733 = vsel %vm717, %v163, 0.0
  %v734 = vsel %vm718, %v164, 0.0
  %v735 = vsel %vm719, %v165, 0.0
  %v736 = vsel %vm720, %v166, 0.0
  %v737 = vsel %vm721, %v167, 0.0
  %v738 = vsel %vm722, %v168, 0.0
  %v739 = vsel %vm723, %v169, 0.0
  %v740 = vsel %vm724, %v170, 0.0
  %v741 = vsel %vm725, %v171, 0.0
  %v742 = vsel %vm726, %v172, 0.0
  %v743 = vsel %vm727, %v173, 0.0
  %v744 = vsel %vm728, %v174, 0.0
  %v745 = vsel %vm729, %v175, 0.0
  %v746 = vsel %vm730, %v176, 0.0
  %747 = vadd.xlane.f32.xlu0 %v731
  %v748 = vpop.xlane.xlu0 %747
  %749 = vadd.xlane.f32.xlu0 %v732
  %v750 = vpop.xlane.xlu0 %749
  %751 = vadd.xlane.f32.xlu0 %v733
  %v752 = vpop.xlane.xlu0 %751
  %753 = vadd.xlane.f32.xlu0 %v734
  %v754 = vpop.xlane.xlu0 %753
  %755 = vadd.xlane.f32.xlu0 %v735
  %v756 = vpop.xlane.xlu0 %755
  %757 = vadd.xlane.f32.xlu0 %v736
  %v758 = vpop.xlane.xlu0 %757
  %759 = vadd.xlane.f32.xlu0 %v737
  %v760 = vpop.xlane.xlu0 %759
  %761 = vadd.xlane.f32.xlu0 %v738
  %v762 = vpop.xlane.xlu0 %761
  %763 = vadd.xlane.f32.xlu0 %v739
  %v764 = vpop.xlane.xlu0 %763
  %765 = vadd.xlane.f32.xlu0 %v740
  %v766 = vpop.xlane.xlu0 %765
  %767 = vadd.xlane.f32.xlu0 %v741
  %v768 = vpop.xlane.xlu0 %767
  %769 = vadd.xlane.f32.xlu0 %v742
  %v770 = vpop.xlane.xlu0 %769
  %771 = vadd.xlane.f32.xlu0 %v743
  %v772 = vpop.xlane.xlu0 %771
  %773 = vadd.xlane.f32.xlu0 %v744
  %v774 = vpop.xlane.xlu0 %773
  %775 = vadd.xlane.f32.xlu0 %v745
  %v776 = vpop.xlane.xlu0 %775
  %777 = vadd.xlane.f32.xlu0 %v746
  %v778 = vpop.xlane.xlu0 %777
  %v779 = vadd.f32 %v699, %v748
  %v780 = vadd.f32 %v700, %v750
  %v781 = vadd.f32 %v701, %v752
  %v782 = vadd.f32 %v702, %v754
  %v783 = vadd.f32 %v703, %v756
  %v784 = vadd.f32 %v704, %v758
  %v785 = vadd.f32 %v705, %v760
  %v786 = vadd.f32 %v706, %v762
  %v787 = vadd.f32 %v707, %v764
  %v788 = vadd.f32 %v708, %v766
  %v789 = vadd.f32 %v709, %v768
  %v790 = vadd.f32 %v710, %v770
  %v791 = vadd.f32 %v711, %v772
  %v792 = vadd.f32 %v712, %v774
  %v793 = vadd.f32 %v713, %v776
  %v794 = vadd.f32 %v714, %v778
  %795 = vst.msk [vmem:[#allocation4] sm:$0xff] %vm666, %v779
  %796 = vst.msk [vmem:[#allocation4 + $0x8] sm:$0xff] %vm666, %v780
  %797 = vst.msk [vmem:[#allocation4 + $0x10] sm:$0xff] %vm666, %v781
  %798 = vst.msk [vmem:[#allocation4 + $0x18] sm:$0xff] %vm666, %v782
  %799 = vst.msk [vmem:[#allocation4 + $0x20] sm:$0xff] %vm666, %v783
  %800 = vst.msk [vmem:[#allocation4 + $0x28] sm:$0xff] %vm666, %v784
  %801 = vst.msk [vmem:[#allocation4 + $0x30] sm:$0xff] %vm666, %v785
  %802 = vst.msk [vmem:[#allocation4 + $0x38] sm:$0xff] %vm666, %v786
  %803 = vst.msk [vmem:[#allocation4 + $0x40] sm:$0xff] %vm666, %v787
  %804 = vst.msk [vmem:[#allocation4 + $0x48] sm:$0xff] %vm666, %v788
  %805 = vst.msk [vmem:[#allocation4 + $0x50] sm:$0xff] %vm666, %v789
  %806 = vst.msk [vmem:[#allocation4 + $0x58] sm:$0xff] %vm666, %v790
  %807 = vst.msk [vmem:[#allocation4 + $0x60] sm:$0xff] %vm666, %v791
  %808 = vst.msk [vmem:[#allocation4 + $0x68] sm:$0xff] %vm666, %v792
  %809 = vst.msk [vmem:[#allocation4 + $0x70] sm:$0xff] %vm666, %v793
  %810 = vst.msk [vmem:[#allocation4 + $0x78] sm:$0xff] %vm666, %v794
  // Predicated region
  $region14: #{nt_xent_loss.1} parent=0 // pred_check
    %p811 = pneg %p11
  $region15: #{nt_xent_loss.1} parent=0 // pred_check_branch
    %813 = sbr.rel (%p811) target = $region17
  $region16: #{nt_xent_loss.1} parent=0 // pred_region
    %v814 = vld [vmem:[#allocation2] sm:$0xff]
    %v815 = vld [vmem:[#allocation2 + $0x8] sm:$0xff]
    %v816 = vld [vmem:[#allocation2 + $0x10] sm:$0xff]
    %v817 = vld [vmem:[#allocation2 + $0x18] sm:$0xff]
    %v818 = vld [vmem:[#allocation2 + $0x20] sm:$0xff]
    %v819 = vld [vmem:[#allocation2 + $0x28] sm:$0xff]
    %v820 = vld [vmem:[#allocation2 + $0x30] sm:$0xff]
    %v821 = vld [vmem:[#allocation2 + $0x38] sm:$0xff]
    %v822 = vld [vmem:[#allocation2 + $0x40] sm:$0xff]
    %v823 = vld [vmem:[#allocation2 + $0x48] sm:$0xff]
    %v824 = vld [vmem:[#allocation2 + $0x50] sm:$0xff]
    %v825 = vld [vmem:[#allocation2 + $0x58] sm:$0xff]
    %v826 = vld [vmem:[#allocation2 + $0x60] sm:$0xff]
    %v827 = vld [vmem:[#allocation2 + $0x68] sm:$0xff]
    %v828 = vld [vmem:[#allocation2 + $0x70] sm:$0xff]
    %v829 = vld [vmem:[#allocation2 + $0x78] sm:$0xff]
    %v830 = vld [vmem:[#allocation3] sm:$0xff]
    %v831 = vld [vmem:[#allocation3 + $0x8] sm:$0xff]
    %v832 = vld [vmem:[#allocation3 + $0x10] sm:$0xff]
    %v833 = vld [vmem:[#allocation3 + $0x18] sm:$0xff]
    %v834 = vld [vmem:[#allocation3 + $0x20] sm:$0xff]
    %v835 = vld [vmem:[#allocation3 + $0x28] sm:$0xff]
    %v836 = vld [vmem:[#allocation3 + $0x30] sm:$0xff]
    %v837 = vld [vmem:[#allocation3 + $0x38] sm:$0xff]
    %v838 = vld [vmem:[#allocation3 + $0x40] sm:$0xff]
    %v839 = vld [vmem:[#allocation3 + $0x48] sm:$0xff]
    %v840 = vld [vmem:[#allocation3 + $0x50] sm:$0xff]
    %v841 = vld [vmem:[#allocation3 + $0x58] sm:$0xff]
    %v842 = vld [vmem:[#allocation3 + $0x60] sm:$0xff]
    %v843 = vld [vmem:[#allocation3 + $0x68] sm:$0xff]
    %v844 = vld [vmem:[#allocation3 + $0x70] sm:$0xff]
    %v845 = vld [vmem:[#allocation3 + $0x78] sm:$0xff]
    %v846 = vlog2.pop %v830
    %v847 = vmul.f32 %v846, 0.6931472
    %v848 = vlog2.pop %v831
    %v849 = vmul.f32 %v848, 0.6931472
    %v850 = vlog2.pop %v832
    %v851 = vmul.f32 %v850, 0.6931472
    %v852 = vlog2.pop %v833
    %v853 = vmul.f32 %v852, 0.6931472
    %v854 = vlog2.pop %v834
    %v855 = vmul.f32 %v854, 0.6931472
    %v856 = vlog2.pop %v835
    %v857 = vmul.f32 %v856, 0.6931472
    %v858 = vlog2.pop %v836
    %v859 = vmul.f32 %v858, 0.6931472
    %v860 = vlog2.pop %v837
    %v861 = vmul.f32 %v860, 0.6931472
    %v862 = vlog2.pop %v838
    %v863 = vmul.f32 %v862, 0.6931472
    %v864 = vlog2.pop %v839
    %v865 = vmul.f32 %v864, 0.6931472
    %v866 = vlog2.pop %v840
    %v867 = vmul.f32 %v866, 0.6931472
    %v868 = vlog2.pop %v841
    %v869 = vmul.f32 %v868, 0.6931472
    %v870 = vlog2.pop %v842
    %v871 = vmul.f32 %v870, 0.6931472
    %v872 = vlog2.pop %v843
    %v873 = vmul.f32 %v872, 0.6931472
    %v874 = vlog2.pop %v844
    %v875 = vmul.f32 %v874, 0.6931472
    %v876 = vlog2.pop %v845
    %v877 = vmul.f32 %v876, 0.6931472
    %v878 = vadd.f32 %v814, %v847
    %v879 = vadd.f32 %v815, %v849
    %v880 = vadd.f32 %v816, %v851
    %v881 = vadd.f32 %v817, %v853
    %v882 = vadd.f32 %v818, %v855
    %v883 = vadd.f32 %v819, %v857
    %v884 = vadd.f32 %v820, %v859
    %v885 = vadd.f32 %v821, %v861
    %v886 = vadd.f32 %v822, %v863
    %v887 = vadd.f32 %v823, %v865
    %v888 = vadd.f32 %v824, %v867
    %v889 = vadd.f32 %v825, %v869
    %v890 = vadd.f32 %v826, %v871
    %v891 = vadd.f32 %v827, %v873
    %v892 = vadd.f32 %v828, %v875
    %v893 = vadd.f32 %v829, %v877
    %v894 = vld [vmem:[#allocation4] sm:$0xff]
    %v895 = vld [vmem:[#allocation4 + $0x8] sm:$0xff]
    %v896 = vld [vmem:[#allocation4 + $0x10] sm:$0xff]
    %v897 = vld [vmem:[#allocation4 + $0x18] sm:$0xff]
    %v898 = vld [vmem:[#allocation4 + $0x20] sm:$0xff]
    %v899 = vld [vmem:[#allocation4 + $0x28] sm:$0xff]
    %v900 = vld [vmem:[#allocation4 + $0x30] sm:$0xff]
    %v901 = vld [vmem:[#allocation4 + $0x38] sm:$0xff]
    %v902 = vld [vmem:[#allocation4 + $0x40] sm:$0xff]
    %v903 = vld [vmem:[#allocation4 + $0x48] sm:$0xff]
    %v904 = vld [vmem:[#allocation4 + $0x50] sm:$0xff]
    %v905 = vld [vmem:[#allocation4 + $0x58] sm:$0xff]
    %v906 = vld [vmem:[#allocation4 + $0x60] sm:$0xff]
    %v907 = vld [vmem:[#allocation4 + $0x68] sm:$0xff]
    %v908 = vld [vmem:[#allocation4 + $0x70] sm:$0xff]
    %v909 = vld [vmem:[#allocation4 + $0x78] sm:$0xff]
    %v910 = vsub.f32 %v878, %v894
    %v911 = vsub.f32 %v879, %v895
    %v912 = vsub.f32 %v880, %v896
    %v913 = vsub.f32 %v881, %v897
    %v914 = vsub.f32 %v882, %v898
    %v915 = vsub.f32 %v883, %v899
    %v916 = vsub.f32 %v884, %v900
    %v917 = vsub.f32 %v885, %v901
    %v918 = vsub.f32 %v886, %v902
    %v919 = vsub.f32 %v887, %v903
    %v920 = vsub.f32 %v888, %v904
    %v921 = vsub.f32 %v889, %v905
    %v922 = vsub.f32 %v890, %v906
    %v923 = vsub.f32 %v891, %v907
    %v924 = vsub.f32 %v892, %v908
    %v925 = vsub.f32 %v893, %v909
    %vm926 = vcmp.lt.s32.totalorder %v196, 8
    %vm927 = vcmp.lt.s32.totalorder %v197, 8
    %vm928 = vcmp.lt.s32.totalorder %v198, 8
    %vm929 = vcmp.lt.s32.totalorder %v199, 8
    %vm930 = vcmp.lt.s32.totalorder %v200, 8
    %vm931 = vcmp.lt.s32.totalorder %v201, 8
    %vm932 = vcmp.lt.s32.totalorder %v202, 8
    %vm933 = vcmp.lt.s32.totalorder %v203, 8
    %vm934 = vcmp.lt.s32.totalorder %v204, 8
    %vm935 = vcmp.lt.s32.totalorder %v205, 8
    %vm936 = vcmp.lt.s32.totalorder %v206, 8
    %vm937 = vcmp.lt.s32.totalorder %v207, 8
    %vm938 = vcmp.lt.s32.totalorder %v208, 8
    %vm939 = vcmp.lt.s32.totalorder %v209, 8
    %vm940 = vcmp.lt.s32.totalorder %v210, 8
    %vm941 = vcmp.lt.s32.totalorder %v211, 8
    %v942 = vsel %vm926, %v910, 0.0
    %v943 = vsel %vm927, %v911, 0.0
    %v944 = vsel %vm928, %v912, 0.0
    %v945 = vsel %vm929, %v913, 0.0
    %v946 = vsel %vm930, %v914, 0.0
    %v947 = vsel %vm931, %v915, 0.0
    %v948 = vsel %vm932, %v916, 0.0
    %v949 = vsel %vm933, %v917, 0.0
    %v950 = vsel %vm934, %v918, 0.0
    %v951 = vsel %vm935, %v919, 0.0
    %v952 = vsel %vm936, %v920, 0.0
    %v953 = vsel %vm937, %v921, 0.0
    %v954 = vsel %vm938, %v922, 0.0
    %v955 = vsel %vm939, %v923, 0.0
    %v956 = vsel %vm940, %v924, 0.0
    %v957 = vsel %vm941, %v925, 0.0
    %958 = vst.msk [vmem:[%s2] sm:$0xff] %vm666, %v942
    %959 = vst.msk [vmem:[%s2 + $0x8] sm:$0xff] %vm666, %v943
    %960 = vst.msk [vmem:[%s2 + $0x10] sm:$0xff] %vm666, %v944
    %961 = vst.msk [vmem:[%s2 + $0x18] sm:$0xff] %vm666, %v945
    %962 = vst.msk [vmem:[%s2 + $0x20] sm:$0xff] %vm666, %v946
    %963 = vst.msk [vmem:[%s2 + $0x28] sm:$0xff] %vm666, %v947
    %964 = vst.msk [vmem:[%s2 + $0x30] sm:$0xff] %vm666, %v948
    %965 = vst.msk [vmem:[%s2 + $0x38] sm:$0xff] %vm666, %v949
    %966 = vst.msk [vmem:[%s2 + $0x40] sm:$0xff] %vm666, %v950
    %967 = vst.msk [vmem:[%s2 + $0x48] sm:$0xff] %vm666, %v951
    %968 = vst.msk [vmem:[%s2 + $0x50] sm:$0xff] %vm666, %v952
    %969 = vst.msk [vmem:[%s2 + $0x58] sm:$0xff] %vm666, %v953
    %970 = vst.msk [vmem:[%s2 + $0x60] sm:$0xff] %vm666, %v954
    %971 = vst.msk [vmem:[%s2 + $0x68] sm:$0xff] %vm666, %v955
    %972 = vst.msk [vmem:[%s2 + $0x70] sm:$0xff] %vm666, %v956
    %973 = vst.msk [vmem:[%s2 + $0x78] sm:$0xff] %vm666, %v957
  $region17: #{nt_xent_loss.1} parent=0 // pred_fallthru
    _
  // Predicated region
  $region18: #{nt_xent_loss.1} parent=0 // pred_check
    _
  $region19: #{nt_xent_loss.1} parent=0 // pred_check_branch
    %975 = sbr.rel (0) target = $region21
  $region20: #{nt_xent_loss.1} parent=0 // pred_region
    _
  $region21: #{nt_xent_loss.1} parent=0 // pred_fallthru
    _
  // Predicated region
  $region22: #{nt_xent_loss.1} parent=0 // pred_check
    _
  $region23: #{nt_xent_loss.1} parent=0 // pred_check_branch
    %977 = sbr.rel (0) target = $region25
  $region24: #{nt_xent_loss.1} parent=0 // pred_region
    _
  $region25: #{nt_xent_loss.1} parent=0 // pred_fallthru
    _

</llo_original>
